<compile_context>
chip_gen: v5e
topology: v5e:2x2
jax: 0.10.0
libtpu: 0.0.40
codegen_flags: <defaults>
</compile_context>

<pallas_src>
import functools

import jax
import jax.numpy as jnp
from jax.experimental import pallas as pl
from jax.experimental.pallas import tpu as pltpu

_LANE = 128  # TPU vreg lane width; pixel tiles are multiples of this.


def _round_up(n, m):
    return ((n + m - 1) // m) * m


def _choose_tile(hw, in_bytes_per_px, out_bytes_per_px, tm, vmem_budget_bytes):
    """Pick a lane-dense pixel tile that fits a double-buffered VMEM budget."""
    per_pixel_bytes = 2 * (in_bytes_per_px + out_bytes_per_px)  # double-buffer
    tm_cap = max(_LANE, (vmem_budget_bytes // per_pixel_bytes) // _LANE * _LANE)
    tm = min(tm, tm_cap, _round_up(hw, _LANE))
    tm = max(_LANE, (tm // _LANE) * _LANE)        # (8,128)-legal, lane-dense
    hwp = _round_up(hw, tm)
    return tm, hwp


# --------------------------------------------------------------------------
# Generic 1x1 conv (+ optional PReLU) kernels
# --------------------------------------------------------------------------
def _pointwise_prelu_kernel(x_ref, w_ref, b_ref, a_ref, o_ref):
    # x_ref: (1, Cin, tm) bf16, pixels on lanes; w_ref: (Cout, Cin) bf16;
    # b_ref: (Cout, 1) f32; a_ref: (1, 1) f32; o_ref: (1, Cout, tm) f32.
    acc = jnp.dot(w_ref[...], x_ref[0], preferred_element_type=jnp.float32)
    acc = acc + b_ref[...]
    acc = jnp.where(acc > 0, acc, a_ref[...] * acc)
    o_ref[0] = acc.astype(o_ref.dtype)


def _pointwise_kernel(x_ref, w_ref, b_ref, o_ref):
    acc = jnp.dot(w_ref[...], x_ref[0], preferred_element_type=jnp.float32)
    acc = acc + b_ref[...]
    o_ref[0] = acc.astype(o_ref.dtype)


@functools.partial(jax.jit, static_argnames=("tm", "vmem_budget_bytes"))
def conv1x1_prelu_nchw(x, weight, bias=None, prelu_alpha=None, *,
                       tm=1024, vmem_budget_bytes=8 * 1024 * 1024):
    """1x1 Conv2d (+ optional single-parameter PReLU) on an NCHW tensor.

    x:      (B, Cin, H, W) float32
    weight: (Cout, Cin)           (PyTorch Conv2d weight (Cout, Cin, 1, 1) squeezed)
    bias:   (Cout,) or None
    prelu_alpha: scalar or None   (nn.PReLU() single shared parameter)
    returns (B, Cout, H, W) float32
    """
    B, Cin, H, W = x.shape
    Cout = weight.shape[0]
    assert weight.shape == (Cout, Cin)
    HW = H * W
    tm, HWp = _choose_tile(HW, 2 * Cin, 4 * Cout, tm, vmem_budget_bytes)

    # Lane-dense operands (pixel axis already last in NCHW -> no transpose).
    x3 = x.reshape(B, Cin, HW)
    if HWp != HW:
        x3 = jnp.pad(x3, ((0, 0), (0, 0), (0, HWp - HW)))
    x3 = x3.astype(jnp.bfloat16)                        # halve HBM traffic
    w_bf16 = weight.astype(jnp.bfloat16)
    b_col = (jnp.zeros((Cout,), jnp.float32) if bias is None
             else bias.astype(jnp.float32)).reshape(Cout, 1)

    grid = (B, HWp // tm)
    x_spec = pl.BlockSpec((1, Cin, tm), lambda b, i: (b, 0, i))
    w_spec = pl.BlockSpec((Cout, Cin), lambda b, i: (0, 0))
    b_spec = pl.BlockSpec((Cout, 1), lambda b, i: (0, 0))
    o_spec = pl.BlockSpec((1, Cout, tm), lambda b, i: (b, 0, i))

    cost = pl.CostEstimate(
        flops=2 * B * HW * Cin * Cout,
        transcendentals=0,
        bytes_accessed=(2 * B * HWp * Cin + 2 * Cin * Cout
                        + 4 * B * HWp * Cout + 4 * Cout),
    )
    params = pltpu.CompilerParams(
        dimension_semantics=("parallel", "parallel"),
        vmem_limit_bytes=32 * 1024 * 1024,
    )
    out_shape = jax.ShapeDtypeStruct((B, Cout, HWp), jnp.float32)

    if prelu_alpha is None:
        out = pl.pallas_call(
            _pointwise_kernel,
            out_shape=out_shape,
            grid=grid,
            in_specs=[x_spec, w_spec, b_spec],
            out_specs=o_spec,
            compiler_params=params,
            cost_estimate=cost,
        )(x3, w_bf16, b_col)
    else:
        a_arr = jnp.asarray(prelu_alpha, jnp.float32).reshape(1, 1)
        a_spec = pl.BlockSpec((1, 1), lambda b, i: (0, 0))
        out = pl.pallas_call(
            _pointwise_prelu_kernel,
            out_shape=out_shape,
            grid=grid,
            in_specs=[x_spec, w_spec, b_spec, a_spec],
            out_specs=o_spec,
            compiler_params=params,
            cost_estimate=cost,
        )(x3, w_bf16, b_col, a_arr)

    return out[:, :, :HW].reshape(B, Cout, H, W)


# --------------------------------------------------------------------------
# Fused branch tail: u = PReLU(conv2(x2)) + x1 ; y = PReLU(conv3(cat([x1, u])))
# The channel concat is realised as two split matmuls: W3 @ cat = W3a@x1 + W3b@u.
# --------------------------------------------------------------------------
def _fused_tail_kernel(x1_ref, x2_ref, w2_ref, b2_ref, a2_ref,
                       w3a_ref, w3b_ref, b3_ref, a3_ref, o_ref):
    # x1_ref: (1, C1, tm) bf16   (interp'd imageA == imageA_sideout)
    # x2_ref: (1, C2, tm) bf16   (interp'd gated ca_A)
    # w2_ref: (C1, C2) bf16 ; w3a_ref/w3b_ref: (C1, C1) bf16
    # b2/b3: (C1, 1) f32 ; a2/a3: (1, 1) f32 ; o_ref: (1, C1, tm) f32
    x1 = x1_ref[0]
    x2 = x2_ref[0]
    u = jnp.dot(w2_ref[...], x2, preferred_element_type=jnp.float32)
    u = u + b2_ref[...]
    u = jnp.where(u > 0, u, a2_ref[...] * u)
    u = u + x1.astype(jnp.float32)

    acc = jnp.dot(w3a_ref[...], x1, preferred_element_type=jnp.float32)
    acc = acc + jnp.dot(w3b_ref[...], u.astype(jnp.bfloat16),
                        preferred_element_type=jnp.float32)
    acc = acc + b3_ref[...]
    acc = jnp.where(acc > 0, acc, a3_ref[...] * acc)
    o_ref[0] = acc.astype(o_ref.dtype)


@functools.partial(jax.jit, static_argnames=("tm", "vmem_budget_bytes"))
def fused_cablock_tail_nchw(x1, x2, w2, b2, a2, w3, b3, a3, *,
                            tm=1024, vmem_budget_bytes=8 * 1024 * 1024):
    """Fused tail of one restormer_cablock branch.

    x1: (B, C1, H, W)  interp(imageA)  (== imageA_sideout after interpolation)
    x2: (B, C2, H, W)  interp(gated ca_A)
    w2: (C1, C2), b2: (C1,), a2: scalar        (convA2 / preluA2)
    w3: (C1, 2*C1), b3: (C1,), a3: scalar      (convA3 / preluA3)
    returns (B, C1, H, W) float32 == PReLU(conv3(cat([x1, PReLU(conv2(x2)) + x1])))
    """
    B, C1, H, W = x1.shape
    _, C2, _, _ = x2.shape
    assert w2.shape == (C1, C2) and w3.shape == (C1, 2 * C1)
    HW = H * W
    tm, HWp = _choose_tile(HW, 2 * (C1 + C2), 4 * C1, tm, vmem_budget_bytes)

    def lanewise(x, C):
        x3 = x.reshape(B, C, HW)
        if HWp != HW:
            x3 = jnp.pad(x3, ((0, 0), (0, 0), (0, HWp - HW)))
        return x3.astype(jnp.bfloat16)

    x1l = lanewise(x1, C1)
    x2l = lanewise(x2, C2)
    w2b = w2.astype(jnp.bfloat16)
    w3a = w3[:, :C1].astype(jnp.bfloat16)
    w3b = w3[:, C1:].astype(jnp.bfloat16)
    b2c = jnp.asarray(b2, jnp.float32).reshape(C1, 1)
    b3c = jnp.asarray(b3, jnp.float32).reshape(C1, 1)
    a2c = jnp.asarray(a2, jnp.float32).reshape(1, 1)
    a3c = jnp.asarray(a3, jnp.float32).reshape(1, 1)

    grid = (B, HWp // tm)
    in_specs = [
        pl.BlockSpec((1, C1, tm), lambda b, i: (b, 0, i)),
        pl.BlockSpec((1, C2, tm), lambda b, i: (b, 0, i)),
        pl.BlockSpec((C1, C2), lambda b, i: (0, 0)),
        pl.BlockSpec((C1, 1), lambda b, i: (0, 0)),
        pl.BlockSpec((1, 1), lambda b, i: (0, 0)),
        pl.BlockSpec((C1, C1), lambda b, i: (0, 0)),
        pl.BlockSpec((C1, C1), lambda b, i: (0, 0)),
        pl.BlockSpec((C1, 1), lambda b, i: (0, 0)),
        pl.BlockSpec((1, 1), lambda b, i: (0, 0)),
    ]
    o_spec = pl.BlockSpec((1, C1, tm), lambda b, i: (b, 0, i))

    cost = pl.CostEstimate(
        flops=2 * B * HW * (C1 * C2 + 2 * C1 * C1),
        transcendentals=0,
        bytes_accessed=(2 * B * HWp * (C1 + C2) + 4 * B * HWp * C1
                        + 2 * (C1 * C2 + 2 * C1 * C1) + 8 * C1 + 8),
    )
    params = pltpu.CompilerParams(
        dimension_semantics=("parallel", "parallel"),
        vmem_limit_bytes=32 * 1024 * 1024,
    )
    out = pl.pallas_call(
        _fused_tail_kernel,
        out_shape=jax.ShapeDtypeStruct((B, C1, HWp), jnp.float32),
        grid=grid,
        in_specs=in_specs,
        out_specs=o_spec,
        compiler_params=params,
        cost_estimate=cost,
    )(x1l, x2l, w2b, b2c, a2c, w3a, w3b, b3c, a3c)

    return out[:, :, :HW].reshape(B, C1, H, W)


if __name__ == "__main__":
    # Small shapes consistent with restormer_cablock defaults:
    #   restormerdim=32, image2text_dim=10, batch=2, spatial 16x16.
    restormerdim = 32
    image2text_dim = 10
    B, H, W = 2, 16, 16

    key = jax.random.PRNGKey(0)
    keys = jax.random.split(key, 12)

    def uniform(k, shape, bound):
        return jax.random.uniform(k, shape, jnp.float32, -bound, bound)

    # --- test 1: convA2-style 1x1 conv + PReLU (10 -> 32) --------------------
    Cin, Cout = image2text_dim, restormerdim
    x = jax.random.normal(keys[0], (B, Cin, H, W), dtype=jnp.float32)
    bound = 1.0 / (Cin ** 0.5)
    w = uniform(keys[1], (Cout, Cin), bound)
    b = uniform(keys[2], (Cout,), bound)
    alpha = jnp.float32(0.25)                      # nn.PReLU() default init

    y = jax.block_until_ready(conv1x1_prelu_nchw(x, w, b, alpha))
    xb = x.astype(jnp.bfloat16).astype(jnp.float32)
    wb = w.astype(jnp.bfloat16).astype(jnp.float32)
    ref = jnp.einsum("oc,bchw->bohw", wb, xb,
                     precision=jax.lax.Precision.HIGHEST) + b[None, :, None, None]
    ref = jnp.where(ref > 0, ref, alpha * ref)
    assert y.shape == (B, Cout, H, W)
    assert jnp.allclose(y, ref, atol=1e-3, rtol=1e-3)

    # --- test 2: imagefeature2textfeature.conv (1x1, 32 -> 10), no PReLU -----
    Cin2, Cout2 = restormerdim, image2text_dim
    x2 = jax.random.normal(keys[3], (B, Cin2, H, W), dtype=jnp.float32)
    bound2 = 1.0 / (Cin2 ** 0.5)
    w2 = uniform(keys[4], (Cout2, Cin2), bound2)
    b2 = uniform(keys[5], (Cout2,), bound2)

    y2 = jax.block_until_ready(conv1x1_prelu_nchw(x2, w2, b2, None))
    x2b = x2.astype(jnp.bfloat16).astype(jnp.float32)
    w2b = w2.astype(jnp.bfloat16).astype(jnp.float32)
    ref2 = jnp.einsum("oc,bchw->bohw", w2b, x2b,
                      precision=jax.lax.Precision.HIGHEST) + b2[None, :, None, None]
    assert y2.shape == (B, Cout2, H, W)
    assert jnp.allclose(y2, ref2, atol=1e-3, rtol=1e-3)

    # --- test 3: fused convA2+preluA2 + residual + concat + convA3+preluA3 ---
    C1, C2 = restormerdim, image2text_dim
    img = jax.random.normal(keys[6], (B, C1, H, W), dtype=jnp.float32)   # interp(imageA)
    ca = jax.random.normal(keys[7], (B, C2, H, W), dtype=jnp.float32)    # interp(ca_A)
    bA2 = 1.0 / (C2 ** 0.5)
    wA2 = uniform(keys[8], (C1, C2), bA2)
    biasA2 = uniform(keys[9], (C1,), bA2)
    aA2 = jnp.float32(0.25)
    bA3 = 1.0 / ((2 * C1) ** 0.5)
    wA3 = uniform(keys[10], (C1, 2 * C1), bA3)
    biasA3 = uniform(keys[11], (C1,), bA3)
    aA3 = jnp.float32(0.25)

    y3 = jax.block_until_ready(
        fused_cablock_tail_nchw(img, ca, wA2, biasA2, aA2, wA3, biasA3, aA3))

    imgb = img.astype(jnp.bfloat16).astype(jnp.float32)
    cab = ca.astype(jnp.bfloat16).astype(jnp.float32)
    wA2b = wA2.astype(jnp.bfloat16).astype(jnp.float32)
    wA3ab = wA3[:, :C1].astype(jnp.bfloat16).astype(jnp.float32)
    wA3bb = wA3[:, C1:].astype(jnp.bfloat16).astype(jnp.float32)
    u = jnp.einsum("oc,bchw->bohw", wA2b, cab,
                   precision=jax.lax.Precision.HIGHEST) + biasA2[None, :, None, None]
    u = jnp.where(u > 0, u, aA2 * u) + imgb
    ub = u.astype(jnp.bfloat16).astype(jnp.float32)
    ref3 = (jnp.einsum("oc,bchw->bohw", wA3ab, imgb,
                       precision=jax.lax.Precision.HIGHEST)
            + jnp.einsum("oc,bchw->bohw", wA3bb, ub,
                         precision=jax.lax.Precision.HIGHEST)
            + biasA3[None, :, None, None])
    ref3 = jnp.where(ref3 > 0, ref3, aA3 * ref3)
    assert y3.shape == (B, C1, H, W)
    assert jnp.allclose(y3, ref3, atol=1e-2, rtol=1e-2)

    print("KERNEL_OK")
</pallas_src>

<mosaic_0001>
module attributes {stable_mosaic.version = 11 : i64} {
  func.func @_pointwise_prelu_kernel(%arg0: i32, %arg1: i32, %arg2: memref<1x10x256xbf16, #tpu.memory_space<vmem>>, %arg3: memref<32x10xbf16, #tpu.memory_space<vmem>>, %arg4: memref<32x1xf32, #tpu.memory_space<vmem>>, %arg5: memref<1x1xf32, #tpu.memory_space<vmem>>, %arg6: memref<1x32x256xf32, #tpu.memory_space<vmem>>) attributes {dimension_semantics = [#tpu.dimension_semantics<parallel>, #tpu.dimension_semantics<parallel>], iteration_bounds = array<i64: 2, 1>, scalar_prefetch = 0 : i64, scratch_operands = 0 : i64, tpu.core_type = #tpu.core_type<tc>, window_params = [{transform_indices = @transform_0, window_bounds = array<i64: 1, 10, 256>}, {pipeline_mode = #tpu.pipeline_mode<synchronous>, transform_indices = @transform_1, window_bounds = array<i64: 32, 10>}, {pipeline_mode = #tpu.pipeline_mode<synchronous>, transform_indices = @transform_2, window_bounds = array<i64: 32, 1>}, {pipeline_mode = #tpu.pipeline_mode<synchronous>, transform_indices = @transform_3, window_bounds = array<i64: 1, 1>}, {transform_indices = @transform_4, window_bounds = array<i64: 1, 32, 256>}]} {
    %c0 = arith.constant 0 : index
    %c0_0 = arith.constant 0 : index
    %0 = vector.load %arg3[%c0, %c0_0] : memref<32x10xbf16, #tpu.memory_space<vmem>>, vector<32x10xbf16>
    %c0_1 = arith.constant 0 : index
    %c0_2 = arith.constant 0 : index
    %c0_3 = arith.constant 0 : index
    %1 = vector.load %arg2[%c0_1, %c0_2, %c0_3] : memref<1x10x256xbf16, #tpu.memory_space<vmem>>, vector<1x10x256xbf16>
    %2 = vector.shape_cast %1 : vector<1x10x256xbf16> to vector<10x256xbf16>
    %cst = arith.constant dense<0.000000e+00> : vector<32x256xf32>
    %3 = tpu.matmul %0, %2, %cst {dimension_numbers = #tpu.dot_dimension_numbers<[1], [0], [0], [1], [0, 0, 1, 1], [], []>} : vector<32x10xbf16>, vector<10x256xbf16>, vector<32x256xf32> -> vector<32x256xf32>
    %c0_4 = arith.constant 0 : index
    %c0_5 = arith.constant 0 : index
    %4 = vector.load %arg4[%c0_4, %c0_5] : memref<32x1xf32, #tpu.memory_space<vmem>>, vector<32x1xf32>
    %5 = vector.broadcast %4 : vector<32x1xf32> to vector<32x256xf32>
    %6 = arith.addf %3, %5 : vector<32x256xf32>
    %cst_6 = arith.constant 0.000000e+00 : f32
    %7 = vector.broadcast %cst_6 : f32 to vector<32x256xf32>
    %8 = arith.cmpf ogt, %6, %7 : vector<32x256xf32>
    %c0_7 = arith.constant 0 : index
    %c0_8 = arith.constant 0 : index
    %9 = vector.load %arg5[%c0_7, %c0_8] : memref<1x1xf32, #tpu.memory_space<vmem>>, vector<1x1xf32>
    %10 = vector.broadcast %9 : vector<1x1xf32> to vector<32x256xf32>
    %11 = arith.mulf %10, %6 : vector<32x256xf32>
    %12 = arith.select %8, %6, %11 : vector<32x256xi1>, vector<32x256xf32>
    %c0_9 = arith.constant 0 : index
    %c0_10 = arith.constant 0 : index
    %c0_11 = arith.constant 0 : index
    %13 = vector.load %arg6[%c0_9, %c0_10, %c0_11] : memref<1x32x256xf32, #tpu.memory_space<vmem>>, vector<1x32x256xf32>
    %14 = vector.shape_cast %13 : vector<1x32x256xf32> to vector<32x256xf32>
    %15 = vector.shape_cast %12 : vector<32x256xf32> to vector<1x32x256xf32>
    tpu.vector_store %arg6[%c0_9, %c0_10, %c0_11], %15 {strides = array<i32>} : memref<1x32x256xf32, #tpu.memory_space<vmem>>, vector<1x32x256xf32>,
    return
  }
  func.func @transform_0(%arg0: i32, %arg1: i32) -> (i32, i32, i32) {
    %c0_i32 = arith.constant 0 : i32
    %c0_i32_0 = arith.constant 0 : i32
    return %arg0, %c0_i32, %arg1 : i32, i32, i32
  }
  func.func @transform_1(%arg0: i32, %arg1: i32) -> (i32, i32) {
    %c0_i32 = arith.constant 0 : i32
    %c0_i32_0 = arith.constant 0 : i32
    %c0_i32_1 = arith.constant 0 : i32
    return %c0_i32, %c0_i32_0 : i32, i32
  }
  func.func @transform_2(%arg0: i32, %arg1: i32) -> (i32, i32) {
    %c0_i32 = arith.constant 0 : i32
    %c0_i32_0 = arith.constant 0 : i32
    %c0_i32_1 = arith.constant 0 : i32
    return %c0_i32, %c0_i32_0 : i32, i32
  }
  func.func @transform_3(%arg0: i32, %arg1: i32) -> (i32, i32) {
    %c0_i32 = arith.constant 0 : i32
    %c0_i32_0 = arith.constant 0 : i32
    %c0_i32_1 = arith.constant 0 : i32
    return %c0_i32, %c0_i32_0 : i32, i32
  }
  func.func @transform_4(%arg0: i32, %arg1: i32) -> (i32, i32, i32) {
    %c0_i32 = arith.constant 0 : i32
    %c0_i32_0 = arith.constant 0 : i32
    return %arg0, %c0_i32, %arg1 : i32, i32, i32
  }
}

</mosaic_0001>

<llo_original>
// kernel: conv1x1_prelu_nchw.1
$region0: #{conv1x1_prelu_nchw.1}
  #allocation0 [shape = 'u32[]', space=smem, size = 0x4, offset = 0x4, fixed_abs, tag = 'smem constant byte address 0x4 - core index']
  #allocation1 [shape = 'u32[72,128]{1,0:T(1,128)}', space=vmem, size = 0x9000, scoped, tag = 'internal scratch']
  #allocation2 [shape = 'f32[1,1]{1,0:T(1,128)S(1)}', space=vmem, size = 0x200, scoped, tag = 'scoped memory for conv1x1_prelu_nchw.1']
  %s0 = inlined_call_operand.vmem [shape: bf16[2,10,256], index: 0, kind: input, shape index: {}]
  %s1 = inlined_call_operand.vmem [shape: bf16[32,10], index: 1, kind: input, shape index: {}]
  %s2 = inlined_call_operand.vmem [shape: f32[32,1], index: 2, kind: input, shape index: {}]
  %s3 = inlined_call_operand.<no memory space> [shape: f32[1,1], index: 3, kind: input, shape index: {}]
  %s4 = inlined_call_operand.vmem [shape: f32[2,32,256], index: 4, kind: output, shape index: {}]
  %s5 = sld [smem:[#allocation0]]
  $region49: #{conv1x1_prelu_nchw.1} parent=0
    _
  %s7 = ssub.s32 1, %s5
  %s8 = scalar_select 0, %s7, %s5
  %v9 = vstv %s3
  %10 = vst [vmem:[#allocation2] sm:$0x1] %v9
  loop: start=0, step=1, limit=4
  $region2: #{conv1x1_prelu_nchw.1} parent=0 // loop_pre_header
    _
  $region3: #{conv1x1_prelu_nchw.1} parent=0 // loop_header
    %s12 = sphi 0, %s16
    %p13 = scmp.ge.s32.totalorder %s12, 4
    %s19 = sphi 0, %s31
    %s20 = sphi 0, %s27
    %s21 = sphi 0, %s19
    %s22 = sphi 0, %s20
    %s23 = sphi 0, %s21
    %s24 = sphi 0, %s22
    %s36 = sphi 0, %s38
    %s39 = sphi 0, %s36
    %s40 = sphi 0, %s39
    %s56 = sphi 0, %s40
    %s60 = sphi 0, %s60
    %s62 = sphi 0, %s60
    %s63 = sphi 0, %s62
    %s77 = sphi 0, %s63
    %s81 = sphi 0, %s81
    %s83 = sphi 0, %s81
    %s84 = sphi 0, %s83
    %s98 = sphi 0, %s84
    %s102 = sphi 0, %s102
    %s104 = sphi 0, %s102
    %s105 = sphi 0, %s104
    %s119 = sphi 0, %s105
    %s127 = sphi 0, %s129
    %s130 = sphi 0, %s127
    %s131 = sphi 0, %s130
    %s147 = sphi 0, %s131
  $region4: #{conv1x1_prelu_nchw.1} parent=0 // loop_header_branch
    %15 = sbr.rel (%p13) target = $region8
  $region5: #{conv1x1_prelu_nchw.1} parent=0 // loop_body
    %s17 = ssub.s32 %s12, 1
    %s18 = ssub.s32 %s12, 2
    %s25 = sadd.s32 1, %s20
    %p26 = scmp.ge.s32.totalorder %s25, 1
    %s27 = scalar_select %p26, 0, %s25
    %s28 = sadd.s32 1, %s19
    %s29 = scalar_select %p26, %s28, %s19
    %p30 = scmp.ge.s32.totalorder %s29, 2
    %s31 = scalar_select %p30, 0, %s29
    %s32 = ssub.s32 %s19, %s31
    %s33 = ssub.s32 %s20, %s27
    %s34 = sor.u32 %s32, %s33
    %p35 = scmp.eq.s32.totalorder %s34, 0
    %s37 = sadd.s32 %s36, 1
    %s38 = scalar_select %p35, %s36, %s37
    %p41 = pneg %p35
    %p42 = scmp.eq.s32.totalorder %s12, 1
    %p43 = por %p41, %p42
    %p44 = scmp.ne.s32.totalorder %s36, %s39
    %p45 = scmp.eq.s32.totalorder %s12, 0
    %p46 = por %p44, %p45
    %p47 = scmp.ne.s32.totalorder %s36, %s39
    %p48 = scmp.eq.s32.totalorder %s17, 1
    %p49 = por %p47, %p48
    %p50 = scmp.ne.s32.totalorder %s39, %s40
    %p51 = scmp.eq.s32.totalorder %s17, 0
    %p52 = por %p50, %p51
    %p53 = scmp.ne.s32.totalorder %s39, %s40
    %p54 = scmp.eq.s32.totalorder %s18, 1
    %p55 = por %p53, %p54
    %p57 = scmp.ne.s32.totalorder %s40, %s56
    %p58 = scmp.eq.s32.totalorder %s18, 0
    %p59 = por %p57, %p58
    %s61 = sadd.s32 %s60, 1
    %p64 = scmp.eq.s32.totalorder %s12, 1
    %p65 = scmp.ne.s32.totalorder %s60, %s62
    %p66 = scmp.eq.s32.totalorder %s12, 0
    %p67 = por %p65, %p66
    %p68 = scmp.ne.s32.totalorder %s60, %s62
    %p69 = scmp.eq.s32.totalorder %s17, 1
    %p70 = por %p68, %p69
    %p71 = scmp.ne.s32.totalorder %s62, %s63
    %p72 = scmp.eq.s32.totalorder %s17, 0
    %p73 = por %p71, %p72
    %p74 = scmp.ne.s32.totalorder %s62, %s63
    %p75 = scmp.eq.s32.totalorder %s18, 1
    %p76 = por %p74, %p75
    %p78 = scmp.ne.s32.totalorder %s63, %s77
    %p79 = scmp.eq.s32.totalorder %s18, 0
    %p80 = por %p78, %p79
    %s82 = sadd.s32 %s81, 1
    %p85 = scmp.eq.s32.totalorder %s12, 1
    %p86 = scmp.ne.s32.totalorder %s81, %s83
    %p87 = scmp.eq.s32.totalorder %s12, 0
    %p88 = por %p86, %p87
    %p89 = scmp.ne.s32.totalorder %s81, %s83
    %p90 = scmp.eq.s32.totalorder %s17, 1
    %p91 = por %p89, %p90
    %p92 = scmp.ne.s32.totalorder %s83, %s84
    %p93 = scmp.eq.s32.totalorder %s17, 0
    %p94 = por %p92, %p93
    %p95 = scmp.ne.s32.totalorder %s83, %s84
    %p96 = scmp.eq.s32.totalorder %s18, 1
    %p97 = por %p95, %p96
    %p99 = scmp.ne.s32.totalorder %s84, %s98
    %p100 = scmp.eq.s32.totalorder %s18, 0
    %p101 = por %p99, %p100
    %s103 = sadd.s32 %s102, 1
    %p106 = scmp.eq.s32.totalorder %s12, 1
    %p107 = scmp.ne.s32.totalorder %s102, %s104
    %p108 = scmp.eq.s32.totalorder %s12, 0
    %p109 = por %p107, %p108
    %p110 = scmp.ne.s32.totalorder %s102, %s104
    %p111 = scmp.eq.s32.totalorder %s17, 1
    %p112 = por %p110, %p111
    %p113 = scmp.ne.s32.totalorder %s104, %s105
    %p114 = scmp.eq.s32.totalorder %s17, 0
    %p115 = por %p113, %p114
    %p116 = scmp.ne.s32.totalorder %s104, %s105
    %p117 = scmp.eq.s32.totalorder %s18, 1
    %p118 = por %p116, %p117
    %p120 = scmp.ne.s32.totalorder %s105, %s119
    %p121 = scmp.eq.s32.totalorder %s18, 0
    %p122 = por %p120, %p121
    %s123 = ssub.s32 %s19, %s31
    %s124 = ssub.s32 %s20, %s27
    %s125 = sor.u32 %s123, %s124
    %p126 = scmp.eq.s32.totalorder %s125, 0
    %s128 = sadd.s32 %s127, 1
    %s129 = scalar_select %p126, %s127, %s128
    %p132 = pneg %p126
    %p133 = scmp.eq.s32.totalorder %s12, 1
    %p134 = por %p132, %p133
    %p135 = scmp.ne.s32.totalorder %s127, %s130
    %p136 = scmp.eq.s32.totalorder %s12, 0
    %p137 = por %p135, %p136
    %p138 = scmp.ne.s32.totalorder %s127, %s130
    %p139 = scmp.eq.s32.totalorder %s17, 1
    %p140 = por %p138, %p139
    %p141 = scmp.ne.s32.totalorder %s130, %s131
    %p142 = scmp.eq.s32.totalorder %s17, 0
    %p143 = por %p141, %p142
    %p144 = scmp.ne.s32.totalorder %s130, %s131
    %p145 = scmp.eq.s32.totalorder %s18, 1
    %p146 = por %p144, %p145
    %p148 = scmp.ne.s32.totalorder %s131, %s147
    %p149 = scmp.eq.s32.totalorder %s18, 0
    %p150 = por %p148, %p149
    %p151 = scmp.le.s32.totalorder 1, %s12
    %p152 = scmp.lt.s32.totalorder %s12, 3
    %p153 = pnand %p151, %p152
    %p154 = pneg %p153
    // Predicated region
    $region9: #{conv1x1_prelu_nchw.1} parent=5 // pred_check
      _
    $region10: #{conv1x1_prelu_nchw.1} parent=5 // pred_check_branch
      %156 = sbr.rel (%p153) target = $region12
    $region11: #{conv1x1_prelu_nchw.1} parent=5 // pred_region
      %s157 = ssub.s32 %s12, 1
      // Predicated region
      $region13: #{conv1x1_prelu_nchw.1} parent=11 // pred_check
        %p158 = pneg %p73
      $region14: #{conv1x1_prelu_nchw.1} parent=11 // pred_check_branch
        %160 = sbr.rel (%p158) target = $region16
      $region15: #{conv1x1_prelu_nchw.1} parent=11 // pred_region
        _
      $region16: #{conv1x1_prelu_nchw.1} parent=11 // pred_fallthru
        _
      // Predicated region
      $region17: #{conv1x1_prelu_nchw.1} parent=11 // pred_check
        %p161 = pneg %p94
      $region18: #{conv1x1_prelu_nchw.1} parent=11 // pred_check_branch
        %163 = sbr.rel (%p161) target = $region20
      $region19: #{conv1x1_prelu_nchw.1} parent=11 // pred_region
        _
      $region20: #{conv1x1_prelu_nchw.1} parent=11 // pred_fallthru
        _
      // Predicated region
      $region21: #{conv1x1_prelu_nchw.1} parent=11 // pred_check
        %p164 = pneg %p115
      $region22: #{conv1x1_prelu_nchw.1} parent=11 // pred_check_branch
        %166 = sbr.rel (%p164) target = $region24
      $region23: #{conv1x1_prelu_nchw.1} parent=11 // pred_region
        _
      $region24: #{conv1x1_prelu_nchw.1} parent=11 // pred_fallthru
        _
    $region12: #{conv1x1_prelu_nchw.1} parent=5 // pred_fallthru
      _
    %p167 = scmp.lt.s32.totalorder %s12, 2
    // Predicated region
    $region25: #{conv1x1_prelu_nchw.1} parent=5 // pred_check
      %p168 = pneg %p167
    $region26: #{conv1x1_prelu_nchw.1} parent=5 // pred_check_branch
      %170 = sbr.rel (%p168) target = $region28
    $region27: #{conv1x1_prelu_nchw.1} parent=5 // pred_region
      // Predicated region
      $region29: #{conv1x1_prelu_nchw.1} parent=27 // pred_check
        %p171 = pneg %p46
      $region30: #{conv1x1_prelu_nchw.1} parent=27 // pred_check_branch
        %173 = sbr.rel (%p171) target = $region32
      $region31: #{conv1x1_prelu_nchw.1} parent=27 // pred_region
        %s174 = smul.u32 2, %s20
        %p175 = scmp.lt.s32.totalorder %s19, 1
        %s176 = scalar_select %p175, %s19, 1
        %p177 = scmp.lt.s32.totalorder %s174, 1
        %s178 = scalar_select %p177, %s174, 1
        %s179 = smul.addr %s176, 4
        %s180 = sadd.s32 %s178, %s179
        %s181 = smul.addr %s180, 4
        %s182 = scalar_lea.vmem %s0, %s181
        %s183 = smul.u32 2, %s20
      $region32: #{conv1x1_prelu_nchw.1} parent=27 // pred_fallthru
        _
    $region28: #{conv1x1_prelu_nchw.1} parent=5 // pred_fallthru
      _
    %p184 = scmp.le.s32.totalorder 1, %s12
    %p185 = scmp.lt.s32.totalorder %s12, 3
    %p186 = pnand %p184, %p185
    %p187 = pneg %p186
    // Predicated region
    $region33: #{conv1x1_prelu_nchw.1} parent=5 // pred_check
      _
    $region34: #{conv1x1_prelu_nchw.1} parent=5 // pred_check_branch
      %189 = sbr.rel (%p186) target = $region36
    $region35: #{conv1x1_prelu_nchw.1} parent=5 // pred_region
      %s190 = ssub.s32 %s12, 1
      %s191 = smul.u32 2, %s22
      %p192 = scmp.lt.s32.totalorder %s21, 1
      %s193 = scalar_select %p192, %s21, 1
      %p194 = scmp.lt.s32.totalorder %s191, 1
      %s195 = scalar_select %p194, %s191, 1
      %s196 = smul.addr %s193, 4
      %s197 = sadd.s32 %s195, %s196
      %s198 = smul.addr %s197, 4
      %s199 = scalar_lea.vmem %s0, %s198
      %p200 = pneg %p52
      %p201 = pneg %p49
      %p202 = pneg %p73
      %p203 = pneg %p70
      %p204 = pneg %p94
      %p205 = pneg %p91
      %p206 = pneg %p115
      %p207 = pneg %p112
      %p208 = pneg %p143
      %p209 = pneg %p140
      %s210 = smul.u32 2, %s22
      %p211 = scmp.lt.s32.totalorder %s21, 1
      %s212 = scalar_select %p211, %s21, 1
      %p213 = scmp.lt.s32.totalorder %s210, 1
      %s214 = scalar_select %p213, %s210, 1
      %s215 = smul.addr %s212, 8
      %s216 = sadd.s32 %s214, %s215
      %s217 = smul.addr %s216, 8
      %s218 = scalar_lea.vmem %s4, %s217
      %s219 = smul.u32 2, %s22
      %p220 = scmp.lt.s32.totalorder %s21, 1
      %s221 = scalar_select %p220, %s21, 1
      %p222 = scmp.lt.s32.totalorder %s219, 1
      %s223 = scalar_select %p222, %s219, 1
      %s224 = smul.addr %s221, 4
      %s225 = sadd.s32 %s223, %s224
      %s226 = smul.addr %s225, 4
      %s227 = scalar_lea.vmem %s0, %s226
      %s228 = smul.u32 2, %s22
      %s229 = smul.u32 2, %s22
      %p230 = scmp.lt.s32.totalorder %s21, 1
      %s231 = scalar_select %p230, %s21, 1
      %p232 = scmp.lt.s32.totalorder %s229, 1
      %s233 = scalar_select %p232, %s229, 1
      %s234 = smul.addr %s231, 8
      %s235 = sadd.s32 %s233, %s234
      %s236 = smul.addr %s235, 8
      %s237 = scalar_lea.vmem %s4, %s236
      %s238 = smul.u32 2, %s22
      %v240 = vld [vmem:[%s1] sm:$0xf]
      %v241 = vld [vmem:[%s1 + $0x4] sm:$0xf]
      %v242 = vld [vmem:[%s1 + $0x8] sm:$0xf]
      %v243 = vld [vmem:[%s1 + $0xc] sm:$0xf]
      %v244 = vld [vmem:[%s227] sm:$0xff]
      %v245 = vld [vmem:[%s227 + $0x8] sm:$0x11]
      %v246 = vld [vmem:[%s2] sm:$0xff]
      %v247 = vld [vmem:[%s2 + $0x8] sm:$0xff]
      %v248 = vld [vmem:[%s2 + $0x10] sm:$0xff]
      %v249 = vld [vmem:[%s2 + $0x18] sm:$0xff]
      %251 = vset.pattern.permute.xlu0 0
      %252 = vperm.xlu0 %251, %v246
      %v253 = vpop.permute.xlu0 %252
      %256 = vset.pattern.permute.xlu0 0
      %257 = vperm.xlu0 %256, %v247
      %v258 = vpop.permute.xlu0 %257
      %261 = vset.pattern.permute.xlu0 0
      %262 = vperm.xlu0 %261, %v248
      %v263 = vpop.permute.xlu0 %262
      %266 = vset.pattern.permute.xlu0 0
      %267 = vperm.xlu0 %266, %v249
      %v268 = vpop.permute.xlu0 %267
      %v274 = vunpack.c.l.b16 %v240
      %v275 = vunpack.c.l.b16 %v241
      %v276 = vunpack.c.l.b16 %v242
      %v277 = vunpack.c.l.b16 %v243
      %v278 = vpack.c.b16 %v275, %v274
      %v279 = vpack.c.b16 %v277, %v276
      %v282 = vunpack.c.l.b16 %v244
      %v283 = vunpack.c.h.b16 %v244
      %v284 = vunpack.c.l.b16 %v245
      %v285 = vunpack.c.h.b16 %v245
      %v286 = vpack.c.b16 %v284, %v282
      %v287 = vpack.c.b16 %v285, %v283
      %vm288 = vcmask 80896
      %v290 = vsel %vm288, %v278, 0
      %v293 = vsel %vm288, %v279, 0
      %vm295 = vcmask 1044480
      %v297 = vsel %vm295, %v286, 0
      %v300 = vsel %vm295, %v287, 0
      %302 = vmatpush.bf16.msra.mxu0 0
      %303 = vmatpush.bf16.msra.mxu0 0
      %304 = vmatpush.bf16.msra.mxu0 0
      %305 = vmatpush.bf16.msra.mxu0 0
      %306 = vmatpush.bf16.msra.mxu0 0
      %307 = vmatpush.bf16.msra.mxu0 0
      %308 = vmatpush.bf16.msra.mxu0 0
      %309 = vmatpush.bf16.msra.mxu0 %v297
      %310 = vmatmul.bf16.gmra.mxu0 %v290
      %v311 = vpop.f32.mrf.mxu0
      %v312 = vadd.f32 %v253, %v311
      %v313 = vpop.f32.mrf.mxu0
      %v314 = vadd.f32 %v258, %v313
      %315 = vmatmul.bf16.gmra.mxu0 %v293
      %v316 = vpop.f32.mrf.mxu0
      %v317 = vadd.f32 %v263, %v316
      %v318 = vpop.f32.mrf.mxu0
      %v319 = vadd.f32 %v268, %v318
      %320 = vdwg.mxu0
      %321 = vmatpush.bf16.msra.mxu0 0
      %322 = vmatpush.bf16.msra.mxu0 0
      %323 = vmatpush.bf16.msra.mxu0 0
      %324 = vmatpush.bf16.msra.mxu0 0
      %325 = vmatpush.bf16.msra.mxu0 0
      %326 = vmatpush.bf16.msra.mxu0 0
      %327 = vmatpush.bf16.msra.mxu0 0
      %328 = vmatpush.bf16.msra.mxu0 %v300
      %329 = vmatmul.bf16.gmra.mxu0 %v290
      %v330 = vpop.f32.mrf.mxu0
      %v331 = vadd.f32 %v253, %v330
      %v332 = vpop.f32.mrf.mxu0
      %v333 = vadd.f32 %v258, %v332
      %334 = vmatmul.bf16.gmra.mxu0 %v293
      %v335 = vpop.f32.mrf.mxu0
      %v336 = vadd.f32 %v263, %v335
      %v337 = vpop.f32.mrf.mxu0
      %v338 = vadd.f32 %v268, %v337
      %339 = vdwg.mxu0
      %vm340 = vcmp.gt.f32.partialorder %v312, 0.0
      %vm341 = vcmp.gt.f32.partialorder %v331, 0.0
      %vm342 = vcmp.gt.f32.partialorder %v314, 0.0
      %vm343 = vcmp.gt.f32.partialorder %v333, 0.0
      %vm344 = vcmp.gt.f32.partialorder %v317, 0.0
      %vm345 = vcmp.gt.f32.partialorder %v336, 0.0
      %vm346 = vcmp.gt.f32.partialorder %v319, 0.0
      %vm347 = vcmp.gt.f32.partialorder %v338, 0.0
      %v348 = vld [vmem:[#allocation2] sm:$0x1]
      %v350 = vperm.slane %v348, 0
      %351 = vset.pattern.permute.xlu0 0
      %352 = vperm.xlu0 %351, %v350
      %v353 = vpop.permute.xlu0 %352
      %v355 = vmul.f32 %v353, %v312
      %v356 = vmul.f32 %v353, %v331
      %v357 = vmul.f32 %v353, %v314
      %v358 = vmul.f32 %v353, %v333
      %v359 = vmul.f32 %v353, %v317
      %v360 = vmul.f32 %v353, %v336
      %v361 = vmul.f32 %v353, %v319
      %v362 = vmul.f32 %v353, %v338
      %v363 = vsel %vm340, %v312, %v355
      %v364 = vsel %vm341, %v331, %v356
      %v365 = vsel %vm342, %v314, %v357
      %v366 = vsel %vm343, %v333, %v358
      %v367 = vsel %vm344, %v317, %v359
      %v368 = vsel %vm345, %v336, %v360
      %v369 = vsel %vm346, %v319, %v361
      %v370 = vsel %vm347, %v338, %v362
      %371 = vst [vmem:[%s237] sm:$0xff] %v363
      %372 = vst [vmem:[%s237 + $0x8] sm:$0xff] %v364
      %373 = vst [vmem:[%s237 + $0x10] sm:$0xff] %v365
      %374 = vst [vmem:[%s237 + $0x18] sm:$0xff] %v366
      %375 = vst [vmem:[%s237 + $0x20] sm:$0xff] %v367
      %376 = vst [vmem:[%s237 + $0x28] sm:$0xff] %v368
      %377 = vst [vmem:[%s237 + $0x30] sm:$0xff] %v369
      %378 = vst [vmem:[%s237 + $0x38] sm:$0xff] %v370
      %s379 = smul.u32 2, %s22
      %p380 = scmp.lt.s32.totalorder %s21, 1
      %s381 = scalar_select %p380, %s21, 1
      %p382 = scmp.lt.s32.totalorder %s379, 1
      %s383 = scalar_select %p382, %s379, 1
      %s384 = smul.addr %s381, 8
      %s385 = sadd.s32 %s383, %s384
      %s386 = smul.addr %s385, 8
      %s387 = scalar_lea.vmem %s4, %s386
      // Predicated region
      $region37: #{conv1x1_prelu_nchw.1} parent=35 // pred_check
        %p388 = pneg %p140
      $region38: #{conv1x1_prelu_nchw.1} parent=35 // pred_check_branch
        %390 = sbr.rel (%p388) target = $region40
      $region39: #{conv1x1_prelu_nchw.1} parent=35 // pred_region
        %s391 = smul.u32 2, %s22
      $region40: #{conv1x1_prelu_nchw.1} parent=35 // pred_fallthru
        _
    $region36: #{conv1x1_prelu_nchw.1} parent=5 // pred_fallthru
      _
    %p392 = scmp.le.s32.totalorder 2, %s12
    // Predicated region
    $region41: #{conv1x1_prelu_nchw.1} parent=5 // pred_check
      %p393 = pneg %p392
    $region42: #{conv1x1_prelu_nchw.1} parent=5 // pred_check_branch
      %395 = sbr.rel (%p393) target = $region44
    $region43: #{conv1x1_prelu_nchw.1} parent=5 // pred_region
      %s396 = ssub.s32 %s12, 2
      // Predicated region
      $region45: #{conv1x1_prelu_nchw.1} parent=43 // pred_check
        %p397 = pneg %p146
      $region46: #{conv1x1_prelu_nchw.1} parent=43 // pred_check_branch
        %399 = sbr.rel (%p397) target = $region48
      $region47: #{conv1x1_prelu_nchw.1} parent=43 // pred_region
        %s400 = smul.u32 2, %s24
        %p401 = scmp.lt.s32.totalorder %s23, 1
        %s402 = scalar_select %p401, %s23, 1
        %p403 = scmp.lt.s32.totalorder %s400, 1
        %s404 = scalar_select %p403, %s400, 1
        %s405 = smul.addr %s402, 8
        %s406 = sadd.s32 %s404, %s405
        %s407 = smul.addr %s406, 8
        %s408 = scalar_lea.vmem %s4, %s407
      $region48: #{conv1x1_prelu_nchw.1} parent=43 // pred_fallthru
        _
    $region44: #{conv1x1_prelu_nchw.1} parent=5 // pred_fallthru
      _
  $region6: #{conv1x1_prelu_nchw.1} parent=0 // loop_footer
    %s16 = sadd.s32 1, %s12
  $region7: #{conv1x1_prelu_nchw.1} parent=0 // loop_footer_branch
    %11 = sbr.rel target = $region3
  $region8: #{conv1x1_prelu_nchw.1} parent=0 // loop_exit
    _

</llo_original>
